<compile_context>
chip_gen: v7x
topology: tpu7x:2x2x1
jax: 0.10.0
libtpu: 0.0.40
codegen_flags: <defaults>
</compile_context>

<pallas_src>
import functools

import jax
import jax.numpy as jnp
from jax.experimental import pallas as pl
from jax.experimental.pallas import tpu as pltpu


# ---------------------------------------------------------------------------
# Generation-aware sizing helpers
# ---------------------------------------------------------------------------

_FALLBACK_VMEM_BYTES = 64 * 1024 * 1024  # v7x per-TC capacity (most restrictive)


@functools.lru_cache(maxsize=1)
def _vmem_capacity_bytes():
    try:
        info = pltpu.get_tpu_info()
        cap = int(getattr(info, "vmem_capacity_bytes", 0) or 0)
        if cap > 0:
            return cap
    except Exception:
        pass
    return _FALLBACK_VMEM_BYTES


def _vmem_limit_bytes():
    # Headroom under physical capacity: ~96 MiB on 128 MiB parts (v5e/v6e),
    # ~48 MiB on v7x's 64 MiB per-TC VMEM.
    cap = _vmem_capacity_bytes()
    return max(32 * 1024 * 1024, min((cap * 3) // 4, 100 * 1024 * 1024))


def _block_byte_budget(vmem_limit, itemsize):
    # Per grid step: 2x double-buffered input + output blocks in the activation
    # dtype (4x block) plus ~3 block-sized f32 temporaries inside the kernel.
    multiplier = 4.0 + 3.0 * (4.0 / float(itemsize))
    budget = int((vmem_limit * 0.5) / multiplier)
    return max(1 << 20, min(budget, 4 << 20))  # 1..4 MiB, generation-aware


def _round_up(n, m):
    return ((n + m - 1) // m) * m


def _pick_lane_tile(hw, bytes_per_lane, budget_bytes):
    """Lane-axis (H*W) tile: full extent if it fits the byte budget, otherwise
    a multiple-of-128 tile near the budget, preferring exact divisors of H*W so
    there is no masked tail block."""
    target = max(128, budget_bytes // max(1, bytes_per_lane))
    if hw <= target:
        return hw  # full extent: always a legal block dim
    floor_tile = max(128, (target // 128) * 128)
    d = floor_tile
    while d >= 128:
        if hw % d == 0:
            break
        d -= 128
    if d >= 128 and hw % d == 0 and d >= max(128, floor_tile // 2):
        return d
    # Fallback: cdiv tail block (stores are masked; tail lanes compute on
    # whatever padding is resident, which is harmless but not NaN-trap clean).
    return floor_tile


def _choose_ln_tiles(b, c, hw, itemsize, budget_bytes):
    """Returns (bt, thw): batch images per block and lane-axis tile."""
    c_pad = _round_up(c, 8)
    image_bytes = c_pad * hw * itemsize
    if image_bytes >= (512 << 10) or b == 1:
        return 1, _pick_lane_tile(hw, c_pad * itemsize, budget_bytes)
    # Small per-image slab: pack several batch images per grid step so the
    # ~0.35us/step overhead is amortized and the pipeline has depth.
    bt_cap = max(1, budget_bytes // image_bytes)
    bt = 1
    for d in range(1, b + 1):
        if b % d == 0 and d <= bt_cap:
            bt = d  # largest divisor of B under the cap -> no batch tail
    return bt, hw


# ---------------------------------------------------------------------------
# Standalone channel LayerNorm (norm1 / norm2 of every TransformerBlock)
# ---------------------------------------------------------------------------

def _ln_withbias_kernel(x_ref, w_ref, b_ref, o_ref):
    # x_ref / o_ref: (Bt, C, THW) — channels on sublanes, spatial on lanes.
    # w_ref / b_ref: (C, 1) resident blocks; broadcast over (Bt, C, THW).
    x = x_ref[...].astype(jnp.float32)
    mu = jnp.mean(x, axis=1, keepdims=True)
    var = jnp.mean(jnp.square(x - mu), axis=1, keepdims=True)  # unbiased=False
    inv = jax.lax.rsqrt(var + 1e-5)
    w = w_ref[...].astype(jnp.float32)
    b = b_ref[...].astype(jnp.float32)
    # Re-read x_ref for the epilogue instead of keeping the centered tile live
    # across the reduction (VMEM loads are cheap; shorter f32 live ranges).
    o_ref[...] = ((x_ref[...].astype(jnp.float32) - mu) * (inv * w) + b).astype(o_ref.dtype)


def _ln_biasfree_kernel(x_ref, w_ref, o_ref):
    # BiasFree: variance about the mean, but the numerator is NOT centered
    # (matches torch BiasFree_LayerNorm).
    x = x_ref[...].astype(jnp.float32)
    mu = jnp.mean(x, axis=1, keepdims=True)
    var = jnp.mean(jnp.square(x - mu), axis=1, keepdims=True)
    inv = jax.lax.rsqrt(var + 1e-5)
    w = w_ref[...].astype(jnp.float32)
    o_ref[...] = (x_ref[...].astype(jnp.float32) * (inv * w)).astype(o_ref.dtype)


@functools.partial(jax.jit, static_argnames=("layernorm_type",))
def layernorm_nchw(x, weight, bias, *, layernorm_type="WithBias"):
    """LayerNorm over the channel dim of an NCHW tensor (== to_4d(LN(to_3d(x))))."""
    B, C, H, W = x.shape
    HW = H * W
    x3 = x.reshape(B, C, HW)  # contiguous view; no transpose

    itemsize = jnp.dtype(x.dtype).itemsize
    vmem_limit = _vmem_limit_bytes()
    budget = _block_byte_budget(vmem_limit, itemsize)
    bt, thw = _choose_ln_tiles(B, C, HW, itemsize, budget)

    # High-trip-count axis (HW tiles) first so the v7x 2-TC split lands on it.
    grid = (pl.cdiv(HW, thw), pl.cdiv(B, bt))

    x_spec = pl.BlockSpec((bt, C, thw), lambda j, b: (b, 0, j))
    o_spec = pl.BlockSpec((bt, C, thw), lambda j, b: (b, 0, j))
    # Params: single resident (C, 1) block (constant index map -> no re-fetch).
    p_spec = pl.BlockSpec((C, 1), lambda j, b: (0, 0))

    cp = pltpu.CompilerParams(
        dimension_semantics=("parallel", "parallel"),
        vmem_limit_bytes=vmem_limit,
    )

    w2 = weight.reshape(C, 1)
    if layernorm_type == "BiasFree":
        out3 = pl.pallas_call(
            _ln_biasfree_kernel,
            out_shape=jax.ShapeDtypeStruct((B, C, HW), x.dtype),
            grid=grid,
            in_specs=[x_spec, p_spec],
            out_specs=o_spec,
            compiler_params=cp,
        )(x3, w2)
    else:
        b2 = bias.reshape(C, 1)
        out3 = pl.pallas_call(
            _ln_withbias_kernel,
            out_shape=jax.ShapeDtypeStruct((B, C, HW), x.dtype),
            grid=grid,
            in_specs=[x_spec, p_spec, p_spec],
            out_specs=o_spec,
            compiler_params=cp,
        )(x3, w2, b2)

    return out3.reshape(B, C, H, W)


# ---------------------------------------------------------------------------
# Fused LayerNorm + 1x1 projection (norm -> Attention.qkv / FFN.project_in)
# ---------------------------------------------------------------------------

def _ln_proj_withbias_kernel(x_ref, w_ref, b_ref, pw_ref, pb_ref, o_ref):
    # x_ref: (C, THW); w/b: (C, 1); pw: (Cout, C); pb: (Cout, 1); o: (Cout, THW)
    x = x_ref[...].astype(jnp.float32)
    mu = jnp.mean(x, axis=0, keepdims=True)
    var = jnp.mean(jnp.square(x - mu), axis=0, keepdims=True)
    inv = jax.lax.rsqrt(var + 1e-5)
    w = w_ref[...].astype(jnp.float32)
    b = b_ref[...].astype(jnp.float32)
    y = (x_ref[...].astype(jnp.float32) - mu) * (inv * w) + b        # (C, THW)
    # 1x1 conv == matmul with contraction over C (the sublane axis of y).
    o = jnp.dot(pw_ref[...].astype(jnp.float32), y,
                preferred_element_type=jnp.float32)
    o = o + pb_ref[...].astype(jnp.float32)
    o_ref[...] = o.astype(o_ref.dtype)


@jax.jit
def layernorm_project_nchw(x, ln_weight, ln_bias, proj_weight, proj_bias):
    """Fused WithBias-LayerNorm (over C) followed by a 1x1 Conv2d projection.

    Equivalent to `Attention.qkv(norm1(x))` / `FeedForward.project_in(norm2(x))`
    with the intermediate normalized activation never round-tripping HBM.
    """
    B, C, H, W = x.shape
    HW = H * W
    Cout = proj_weight.shape[0]
    x3 = x.reshape(B, C, HW)

    itemsize = jnp.dtype(x.dtype).itemsize
    vmem_limit = _vmem_limit_bytes()
    budget = _block_byte_budget(vmem_limit, itemsize)
    bytes_per_lane = (_round_up(C, 8) + _round_up(Cout, 8)) * itemsize
    thw = _pick_lane_tile(HW, bytes_per_lane, budget)

    grid = (pl.cdiv(HW, thw), B)  # high-trip-count axis first

    x_spec = pl.BlockSpec((None, C, thw), lambda j, b: (b, 0, j))
    o_spec = pl.BlockSpec((None, Cout, thw), lambda j, b: (b, 0, j))
    lnp_spec = pl.BlockSpec((C, 1), lambda j, b: (0, 0))
    pw_spec = pl.BlockSpec((Cout, C), lambda j, b: (0, 0))
    pb_spec = pl.BlockSpec((Cout, 1), lambda j, b: (0, 0))

    cp = pltpu.CompilerParams(
        dimension_semantics=("parallel", "parallel"),
        vmem_limit_bytes=vmem_limit,
    )

    out3 = pl.pallas_call(
        _ln_proj_withbias_kernel,
        out_shape=jax.ShapeDtypeStruct((B, Cout, HW), x.dtype),
        grid=grid,
        in_specs=[x_spec, lnp_spec, lnp_spec, pw_spec, pb_spec],
        out_specs=o_spec,
        compiler_params=cp,
    )(x3, ln_weight.reshape(C, 1), ln_bias.reshape(C, 1),
      proj_weight.reshape(Cout, C), proj_bias.reshape(Cout, 1))

    return out3.reshape(B, Cout, H, W)


# ---------------------------------------------------------------------------
# References & self-test
# ---------------------------------------------------------------------------

def _layernorm_reference(x, weight, bias, layernorm_type):
    xf = x.astype(jnp.float32)
    mu = jnp.mean(xf, axis=1, keepdims=True)
    var = jnp.mean((xf - mu) ** 2, axis=1, keepdims=True)
    w = weight.reshape(1, -1, 1, 1)
    if layernorm_type == "BiasFree":
        y = xf / jnp.sqrt(var + 1e-5) * w
    else:
        y = (xf - mu) / jnp.sqrt(var + 1e-5) * w + bias.reshape(1, -1, 1, 1)
    return y.astype(x.dtype)


if __name__ == "__main__":
    key = jax.random.PRNGKey(0)
    ok = True

    # --- standalone channel LayerNorm -------------------------------------
    shapes = [
        (2, 4, 16, 16),     # small demo: multiple batch images packed per block
        (2, 6, 24, 40),     # odd C / non-128 spatial extent (full-extent block)
        (1, 64, 256, 256),  # large: exercises the lane-tiled multi-block path
    ]
    for (B, C, H, W) in shapes:
        key, kx, kw, kb = jax.random.split(key, 4)
        x = jax.random.normal(kx, (B, C, H, W), dtype=jnp.float32)
        weight = 1.0 + 0.1 * jax.random.normal(kw, (C,), dtype=jnp.float32)
        bias = 0.1 * jax.random.normal(kb, (C,), dtype=jnp.float32)

        for ln_type in ("WithBias", "BiasFree"):
            out = layernorm_nchw(x, weight, bias, layernorm_type=ln_type)
            out = jax.block_until_ready(out)
            ref = _layernorm_reference(x, weight, bias, ln_type)
            err = float(jnp.max(jnp.abs(out - ref)))
            if not (out.shape == (B, C, H, W) and err < 1e-4):
                ok = False
                print(f"LN MISMATCH {ln_type} {(B, C, H, W)}: max abs err = {err}")

    # --- fused LayerNorm + 1x1 projection (norm1 -> Attention.qkv) ---------
    B, C, H, W = 2, 32, 16, 16
    Cout = 3 * C
    key, kx, kw, kb, kpw, kpb = jax.random.split(key, 6)
    x = jax.random.normal(kx, (B, C, H, W), dtype=jnp.float32)
    ln_w = 1.0 + 0.1 * jax.random.normal(kw, (C,), dtype=jnp.float32)
    ln_b = 0.1 * jax.random.normal(kb, (C,), dtype=jnp.float32)
    pw = 0.1 * jax.random.normal(kpw, (Cout, C), dtype=jnp.float32)
    pb = 0.1 * jax.random.normal(kpb, (Cout,), dtype=jnp.float32)

    out = jax.block_until_ready(layernorm_project_nchw(x, ln_w, ln_b, pw, pb))
    ln_ref = _layernorm_reference(x, ln_w, ln_b, "WithBias")
    ref = jnp.einsum("oc,bchw->bohw", pw, ln_ref) + pb.reshape(1, -1, 1, 1)
    err = float(jnp.max(jnp.abs(out - ref)))
    tol = 1e-3 + 2e-2 * float(jnp.max(jnp.abs(ref)))  # within MXU matmul precision
    if not (out.shape == (B, Cout, H, W) and err < tol):
        ok = False
        print(f"FUSED MISMATCH: max abs err = {err} (tol {tol})")

    if ok:
        print("KERNEL_OK")
</pallas_src>

<mosaic_0001>
module attributes {stable_mosaic.version = 11 : i64} {
  func.func @_ln_withbias_kernel(%arg0: i32, %arg1: i32, %arg2: memref<2x4x256xf32, #tpu.memory_space<vmem>>, %arg3: memref<4x1xf32, #tpu.memory_space<vmem>>, %arg4: memref<4x1xf32, #tpu.memory_space<vmem>>, %arg5: memref<2x4x256xf32, #tpu.memory_space<vmem>>) attributes {dimension_semantics = [#tpu.dimension_semantics<parallel>, #tpu.dimension_semantics<parallel>], iteration_bounds = array<i64: 1, 1>, scalar_prefetch = 0 : i64, scratch_operands = 0 : i64, tpu.core_type = #tpu.core_type<tc>, window_params = [{transform_indices = @transform_0, window_bounds = array<i64: 2, 4, 256>}, {pipeline_mode = #tpu.pipeline_mode<synchronous>, transform_indices = @transform_1, window_bounds = array<i64: 4, 1>}, {pipeline_mode = #tpu.pipeline_mode<synchronous>, transform_indices = @transform_2, window_bounds = array<i64: 4, 1>}, {transform_indices = @transform_3, window_bounds = array<i64: 2, 4, 256>}]} {
    %c0 = arith.constant 0 : index
    %c0_0 = arith.constant 0 : index
    %c0_1 = arith.constant 0 : index
    %0 = vector.load %arg2[%c0, %c0_0, %c0_1] : memref<2x4x256xf32, #tpu.memory_space<vmem>>, vector<2x4x256xf32>
    %cst = arith.constant dense<0.000000e+00> : vector<2x256xf32>
    %1 = vector.multi_reduction <add>, %0, %cst [1] : vector<2x4x256xf32> to vector<2x256xf32>
    %2 = vector.shape_cast %1 : vector<2x256xf32> to vector<2x1x256xf32>
    %cst_2 = arith.constant 4.000000e+00 : f32
    %3 = vector.broadcast %cst_2 : f32 to vector<2x1x256xf32>
    %4 = arith.divf %2, %3 : vector<2x1x256xf32>
    %5 = vector.broadcast %4 : vector<2x1x256xf32> to vector<2x4x256xf32>
    %6 = arith.subf %0, %5 : vector<2x4x256xf32>
    %7 = arith.mulf %6, %6 : vector<2x4x256xf32>
    %cst_3 = arith.constant dense<0.000000e+00> : vector<2x256xf32>
    %8 = vector.multi_reduction <add>, %7, %cst_3 [1] : vector<2x4x256xf32> to vector<2x256xf32>
    %9 = vector.shape_cast %8 : vector<2x256xf32> to vector<2x1x256xf32>
    %cst_4 = arith.constant 4.000000e+00 : f32
    %10 = vector.broadcast %cst_4 : f32 to vector<2x1x256xf32>
    %11 = arith.divf %9, %10 : vector<2x1x256xf32>
    %cst_5 = arith.constant 9.99999974E-6 : f32
    %12 = vector.broadcast %cst_5 : f32 to vector<2x1x256xf32>
    %13 = arith.addf %11, %12 : vector<2x1x256xf32>
    %14 = math.rsqrt %13 : vector<2x1x256xf32>
    %c0_6 = arith.constant 0 : index
    %c0_7 = arith.constant 0 : index
    %15 = vector.load %arg3[%c0_6, %c0_7] : memref<4x1xf32, #tpu.memory_space<vmem>>, vector<4x1xf32>
    %c0_8 = arith.constant 0 : index
    %c0_9 = arith.constant 0 : index
    %16 = vector.load %arg4[%c0_8, %c0_9] : memref<4x1xf32, #tpu.memory_space<vmem>>, vector<4x1xf32>
    %c0_10 = arith.constant 0 : index
    %c0_11 = arith.constant 0 : index
    %c0_12 = arith.constant 0 : index
    %17 = vector.load %arg2[%c0_10, %c0_11, %c0_12] : memref<2x4x256xf32, #tpu.memory_space<vmem>>, vector<2x4x256xf32>
    %18 = vector.broadcast %4 : vector<2x1x256xf32> to vector<2x4x256xf32>
    %19 = arith.subf %17, %18 : vector<2x4x256xf32>
    %20 = vector.shape_cast %15 : vector<4x1xf32> to vector<1x4x1xf32>
    %21 = vector.broadcast %14 : vector<2x1x256xf32> to vector<2x4x256xf32>
    %22 = vector.broadcast %20 : vector<1x4x1xf32> to vector<2x4x256xf32>
    %23 = arith.mulf %21, %22 : vector<2x4x256xf32>
    %24 = arith.mulf %19, %23 : vector<2x4x256xf32>
    %25 = vector.shape_cast %16 : vector<4x1xf32> to vector<1x4x1xf32>
    %26 = vector.broadcast %25 : vector<1x4x1xf32> to vector<2x4x256xf32>
    %27 = arith.addf %24, %26 : vector<2x4x256xf32>
    %c0_13 = arith.constant 0 : index
    %c0_14 = arith.constant 0 : index
    %c0_15 = arith.constant 0 : index
    %28 = vector.load %arg5[%c0_13, %c0_14, %c0_15] : memref<2x4x256xf32, #tpu.memory_space<vmem>>, vector<2x4x256xf32>
    tpu.vector_store %arg5[%c0_13, %c0_14, %c0_15], %27 {strides = array<i32>} : memref<2x4x256xf32, #tpu.memory_space<vmem>>, vector<2x4x256xf32>,
    return
  }
  func.func @transform_0(%arg0: i32, %arg1: i32) -> (i32, i32, i32) {
    %c0_i32 = arith.constant 0 : i32
    %c0_i32_0 = arith.constant 0 : i32
    return %arg1, %c0_i32, %arg0 : i32, i32, i32
  }
  func.func @transform_1(%arg0: i32, %arg1: i32) -> (i32, i32) {
    %c0_i32 = arith.constant 0 : i32
    %c0_i32_0 = arith.constant 0 : i32
    %c0_i32_1 = arith.constant 0 : i32
    return %c0_i32, %c0_i32_0 : i32, i32
  }
  func.func @transform_2(%arg0: i32, %arg1: i32) -> (i32, i32) {
    %c0_i32 = arith.constant 0 : i32
    %c0_i32_0 = arith.constant 0 : i32
    %c0_i32_1 = arith.constant 0 : i32
    return %c0_i32, %c0_i32_0 : i32, i32
  }
  func.func @transform_3(%arg0: i32, %arg1: i32) -> (i32, i32, i32) {
    %c0_i32 = arith.constant 0 : i32
    %c0_i32_0 = arith.constant 0 : i32
    return %arg1, %c0_i32, %arg0 : i32, i32, i32
  }
}

</mosaic_0001>

<llo_original>
// kernel: layernorm_nchw.1
$region0: #{layernorm_nchw.1}
  #allocation0 [shape = 'u32[]', space=smem, size = 0x4, offset = 0x4, fixed_abs, tag = 'smem constant byte address 0x4 - core index']
  #allocation1 [shape = 'u32[144,128]{1,0:T(1,128)}', space=vmem, size = 0x12000, scoped, tag = 'internal scratch']
  %s0 = inlined_call_operand.vmem [shape: f32[2,4,256], index: 0, kind: input, shape index: {}]
  %s1 = inlined_call_operand.vmem [shape: f32[4,1], index: 1, kind: input, shape index: {}]
  %s2 = inlined_call_operand.vmem [shape: f32[4,1], index: 2, kind: input, shape index: {}]
  %s3 = inlined_call_operand.vmem [shape: f32[2,4,256], index: 3, kind: output, shape index: {}]
  %s4 = sld [smem:[#allocation0]]
  $region22: #{layernorm_nchw.1} parent=0
    _
  %s6 = ssub.s32 1, %s4
  %s7 = scalar_select 0, %s6, %s4
  // Predicated region
  $region2: #{layernorm_nchw.1} parent=0 // pred_check
    _
  $region3: #{layernorm_nchw.1} parent=0 // pred_check_branch
    %9 = sbr.rel (0) target = $region5
  $region4: #{layernorm_nchw.1} parent=0 // pred_region
    _
  $region5: #{layernorm_nchw.1} parent=0 // pred_fallthru
    _
  // Predicated region
  $region6: #{layernorm_nchw.1} parent=0 // pred_check
    _
  $region7: #{layernorm_nchw.1} parent=0 // pred_check_branch
    %11 = sbr.rel (0) target = $region9
  $region8: #{layernorm_nchw.1} parent=0 // pred_region
    _
  $region9: #{layernorm_nchw.1} parent=0 // pred_fallthru
    _
  // Predicated region
  $region10: #{layernorm_nchw.1} parent=0 // pred_check
    _
  $region11: #{layernorm_nchw.1} parent=0 // pred_check_branch
    %13 = sbr.rel (0) target = $region13
  $region12: #{layernorm_nchw.1} parent=0 // pred_region
    _
  $region13: #{layernorm_nchw.1} parent=0 // pred_fallthru
    _
  %v14 = vld [vmem:[%s0] sm:$0xff]
  %v15 = vld [vmem:[%s0 + $0x8] sm:$0xff]
  %v18 = vcombine.high %v14, %v14
  %v19 = vcombine.high %v15, %v15
  %vm22 = vcmask 1043456
  %v23 = vsel %vm22, %v14, 0.0
  %v24 = vrot.slane %v23, 4
  %v25 = vadd.f32 %v23, %v24
  %v26 = vrot.slane %v25, 2
  %v27 = vadd.f32 %v25, %v26
  %v28 = vrot.slane %v27, 1
  %v29 = vadd.f32 %v27, %v28
  %v30 = vsel %vm22, %v18, 0.0
  %v31 = vrot.slane %v30, 4
  %v32 = vadd.f32 %v30, %v31
  %v33 = vrot.slane %v32, 2
  %v34 = vadd.f32 %v32, %v33
  %v35 = vrot.slane %v34, 1
  %v36 = vadd.f32 %v34, %v35
  %v37 = vsel %vm22, %v15, 0.0
  %v38 = vrot.slane %v37, 4
  %v39 = vadd.f32 %v37, %v38
  %v40 = vrot.slane %v39, 2
  %v41 = vadd.f32 %v39, %v40
  %v42 = vrot.slane %v41, 1
  %v43 = vadd.f32 %v41, %v42
  %v44 = vsel %vm22, %v19, 0.0
  %v45 = vrot.slane %v44, 4
  %v46 = vadd.f32 %v44, %v45
  %v47 = vrot.slane %v46, 2
  %v48 = vadd.f32 %v46, %v47
  %v49 = vrot.slane %v48, 1
  %v50 = vadd.f32 %v48, %v49
  %v51 = vrcp.pop 4.0
  %v52 = vmul.f32 %v29, %v51
  %v53 = vmul.f32 %v36, %v51
  %v54 = vmul.f32 %v43, %v51
  %v55 = vmul.f32 %v50, %v51
  %v60 = vcombine.low %v52, %v53
  %v61 = vcombine.low %v54, %v55
  %v64 = vsub.f32 %v14, %v60
  %v65 = vsub.f32 %v15, %v61
  %v66 = vmul.f32 %v64, %v64
  %v67 = vmul.f32 %v65, %v65
  %v70 = vcombine.high %v66, %v66
  %v71 = vcombine.high %v67, %v67
  %v74 = vsel %vm22, %v66, 0.0
  %v75 = vrot.slane %v74, 4
  %v76 = vadd.f32 %v74, %v75
  %v77 = vrot.slane %v76, 2
  %v78 = vadd.f32 %v76, %v77
  %v79 = vrot.slane %v78, 1
  %v80 = vadd.f32 %v78, %v79
  %v81 = vsel %vm22, %v70, 0.0
  %v82 = vrot.slane %v81, 4
  %v83 = vadd.f32 %v81, %v82
  %v84 = vrot.slane %v83, 2
  %v85 = vadd.f32 %v83, %v84
  %v86 = vrot.slane %v85, 1
  %v87 = vadd.f32 %v85, %v86
  %v88 = vsel %vm22, %v67, 0.0
  %v89 = vrot.slane %v88, 4
  %v90 = vadd.f32 %v88, %v89
  %v91 = vrot.slane %v90, 2
  %v92 = vadd.f32 %v90, %v91
  %v93 = vrot.slane %v92, 1
  %v94 = vadd.f32 %v92, %v93
  %v95 = vsel %vm22, %v71, 0.0
  %v96 = vrot.slane %v95, 4
  %v97 = vadd.f32 %v95, %v96
  %v98 = vrot.slane %v97, 2
  %v99 = vadd.f32 %v97, %v98
  %v100 = vrot.slane %v99, 1
  %v101 = vadd.f32 %v99, %v100
  %v102 = vmul.f32 %v80, %v51
  %v103 = vmul.f32 %v87, %v51
  %v104 = vmul.f32 %v94, %v51
  %v105 = vmul.f32 %v101, %v51
  %v106 = vadd.f32 %v102, 1e-05
  %v107 = vadd.f32 %v103, 1e-05
  %v108 = vadd.f32 %v104, 1e-05
  %v109 = vadd.f32 %v105, 1e-05
  %v110 = vrsqrt.pop %v106
  %v111 = vrsqrt.pop %v107
  %v112 = vrsqrt.pop %v108
  %v113 = vrsqrt.pop %v109
  %v114 = vld [vmem:[%s1] sm:$0xf]
  %v115 = vld [vmem:[%s2] sm:$0xf]
  %117 = vset.pattern.permute.xlu0 0
  %118 = vperm.xlu0 %117, %v114
  %v119 = vpop.permute.xlu0 %118
  %v121 = vmul.f32 %v110, %v119
  %v122 = vmul.f32 %v111, %v119
  %v123 = vmul.f32 %v112, %v119
  %v124 = vmul.f32 %v113, %v119
  %v129 = vcombine.low %v121, %v122
  %v130 = vcombine.low %v123, %v124
  %v133 = vmul.f32 %v64, %v129
  %v134 = vmul.f32 %v65, %v130
  %136 = vset.pattern.permute.xlu0 0
  %137 = vperm.xlu0 %136, %v115
  %v138 = vpop.permute.xlu0 %137
  %v140 = vunpack.c.l.s4 839922192
  %v141 = vunpack.c.0.s8 %v140
  %v142 = vlaneseq
  %v143 = vshrl.u32 %v142, 7
  %v144 = vsub.s32 %v141, %v143
  %v145 = vrot.slane %v138, %v144
  %v147 = vadd.f32 %v133, %v145
  %v148 = vadd.f32 %v134, %v145
  %149 = vst [vmem:[%s3] sm:$0xff] %v147
  %150 = vst [vmem:[%s3 + $0x8] sm:$0xff] %v148
  // Predicated region
  $region14: #{layernorm_nchw.1} parent=0 // pred_check
    _
  $region15: #{layernorm_nchw.1} parent=0 // pred_check_branch
    %152 = sbr.rel (0) target = $region17
  $region16: #{layernorm_nchw.1} parent=0 // pred_region
    _
  $region17: #{layernorm_nchw.1} parent=0 // pred_fallthru
    _
  // Predicated region
  $region18: #{layernorm_nchw.1} parent=0 // pred_check
    _
  $region19: #{layernorm_nchw.1} parent=0 // pred_check_branch
    %154 = sbr.rel (0) target = $region21
  $region20: #{layernorm_nchw.1} parent=0 // pred_region
    _
  $region21: #{layernorm_nchw.1} parent=0 // pred_fallthru
    _

</llo_original>
